<compile_context>
chip_gen: v5e
topology: v5e:2x2
jax: 0.10.0
libtpu: 0.0.40
codegen_flags: <defaults>
</compile_context>

<pallas_src>
import functools

import jax
import jax.numpy as jnp
from jax.experimental import pallas as pl
from jax.experimental.pallas import tpu as pltpu


def _round_up(x, m):
    return ((x + m - 1) // m) * m


# ---------------------------------------------------------------------------
# One-time capability probe: can this JAX single-buffer a grid-invariant input
# via pl.Buffered(1)?  (Halves the basis VMEM footprint; matters on v7x.)
# ---------------------------------------------------------------------------
@functools.lru_cache(maxsize=1)
def _buffered_one_supported():
    if not hasattr(pl, "Buffered"):
        return False
    try:
        def _probe_kernel(x_ref, o_ref):
            o_ref[...] = x_ref[...] * 2.0

        probe = pl.pallas_call(
            _probe_kernel,
            out_shape=jax.ShapeDtypeStruct((8, 128), jnp.float32),
            grid_spec=pltpu.PrefetchScalarGridSpec(
                num_scalar_prefetch=0,
                grid=(1,),
                in_specs=[pl.BlockSpec((8, 128), lambda i: (0, 0),
                                       pipeline_mode=pl.Buffered(1))],
                out_specs=pl.BlockSpec((8, 128), lambda i: (0, 0)),
            ),
        )
        # Lowering (includes the Mosaic pipeline) is enough to validate support.
        jax.jit(probe).lower(jax.ShapeDtypeStruct((8, 128), jnp.float32))
        return True
    except Exception:
        return False


# ---------------------------------------------------------------------------
# Pallas kernel: two MXU matmuls (cos / sin bases) + f32 magnitude epilogue
# ---------------------------------------------------------------------------
def _stft_mag_kernel(frames_ref, cos_ref, sin_ref, out_ref):
    # frames_ref : (W, tt)      bf16  frame tile, window samples on sublanes,
    #                                 time frames on lanes
    # cos_ref    : (F_pad, W)   bf16  window*cos, k = 0..n_fft/2 (+ zero pad rows)
    # sin_ref    : (F_half, W)  bf16  window*sin, k = 0..n_fft/2 - 1
    # out_ref    : (F_pad, tt)  caller dtype
    f = frames_ref[...]
    re = jnp.dot(cos_ref[...], f, preferred_element_type=jnp.float32)   # (F_pad, tt)
    im = jnp.dot(sin_ref[...], f, preferred_element_type=jnp.float32)   # (F_half, tt)
    f_half = im.shape[0]                       # multiple of 8 -> sublane-aligned slices
    re_lo = re[:f_half]
    re_hi = re[f_half:]                        # Nyquist row (+ zero pad rows); im == 0 there
    # lax.sqrt lands on the EUP slot -> free filler under the MXU.
    out_ref[:f_half, :] = jax.lax.sqrt(re_lo * re_lo + im * im + 1e-6).astype(out_ref.dtype)
    out_ref[f_half:, :] = jax.lax.sqrt(re_hi * re_hi + 1e-6).astype(out_ref.dtype)


def _vmem_limit_bytes(W, f_pad, f_half, tt, out_itemsize, single_buffer):
    basis_bufs = 1 if single_buffer else 2
    est = (
        2 * (W * tt * 2)                      # frames tile (bf16, double-buffered)
        + basis_bufs * (f_pad * W * 2)        # cos basis (bf16)
        + basis_bufs * (f_half * W * 2)       # sin basis (bf16)
        + 2 * (f_pad * tt * out_itemsize)     # output tile (double-buffered)
        + (2 * f_pad + f_half) * tt * 4       # f32 re/im/mag temporaries
    )
    est = int(est * 1.25) + (4 << 20)         # headroom for compiler scratch
    return max(32 << 20, min(est, 48 << 20))  # 48 MiB cap keeps v7x (64 MiB VMEM) safe


def _stft_magnitude_pallas(frames_t, cos_t, sin_t, *, out_dtype, tt, single_buffer):
    B, W, T_pad = frames_t.shape
    f_pad, W2 = cos_t.shape
    f_half, W3 = sin_t.shape
    assert W2 == W and W3 == W and T_pad % tt == 0, (frames_t.shape, cos_t.shape, sin_t.shape, tt)

    basis_kwargs = {}
    if single_buffer:
        # Bases never change across grid steps -> single-buffer them.
        basis_kwargs["pipeline_mode"] = pl.Buffered(1)

    out_itemsize = jnp.dtype(out_dtype).itemsize
    return pl.pallas_call(
        _stft_mag_kernel,
        out_shape=jax.ShapeDtypeStruct((B, f_pad, T_pad), out_dtype),
        grid_spec=pltpu.PrefetchScalarGridSpec(
            num_scalar_prefetch=0,
            grid=(B, T_pad // tt),
            in_specs=[
                pl.BlockSpec((None, W, tt), lambda b, j: (b, 0, j)),
                pl.BlockSpec((f_pad, W), lambda b, j: (0, 0), **basis_kwargs),
                pl.BlockSpec((f_half, W), lambda b, j: (0, 0), **basis_kwargs),
            ],
            out_specs=pl.BlockSpec((None, f_pad, tt), lambda b, j: (b, 0, j)),
        ),
        compiler_params=pltpu.CompilerParams(
            dimension_semantics=("parallel", "parallel"),
            vmem_limit_bytes=_vmem_limit_bytes(W, f_pad, f_half, tt,
                                               out_itemsize, single_buffer),
        ),
    )(frames_t, cos_t, sin_t)


# ---------------------------------------------------------------------------
# Jitted forward (module-level so the compile cache is keyed on shapes/dtypes,
# not on LinearSpectrogram object identity; bases are traced args).
# ---------------------------------------------------------------------------
@functools.partial(jax.jit,
                   static_argnames=("n_fft", "win_length", "hop_length",
                                    "single_buffer"))
def _linear_spectrogram_fwd(y, cos_t, sin_t, *, n_fft, win_length, hop_length,
                            single_buffer):
    if y.ndim == 3:
        y = jnp.squeeze(y, axis=1)
    in_dtype = y.dtype
    f_pad = cos_t.shape[0]
    f_half = sin_t.shape[0]
    n_freq = f_half + 1

    # reflect pad, like F.pad(..., mode='reflect')
    pad_l = (win_length - hop_length) // 2
    pad_r = (win_length - hop_length + 1) // 2
    y_pad = jnp.pad(y, ((0, 0), (pad_l, pad_r)), mode="reflect")
    # Cast to the MXU compute dtype *before* framing -> the gather writes bf16.
    y_pad = y_pad.astype(cos_t.dtype)

    B, Lp = y_pad.shape
    T = 1 + (Lp - n_fft) // hop_length

    # Frame extraction directly in (B, W, T) layout (window samples on sublanes,
    # time on lanes) so the kernel emits the (B, F, T) result with no transpose.
    # TODO(synk): fold framing into the kernel via pl.ds over the raw audio
    # (win_length == 4 * hop_length) to drop the 4x read-amplified frames slab.
    idx = (jnp.arange(T, dtype=jnp.int32)[None, :] * hop_length
           + jnp.arange(n_fft, dtype=jnp.int32)[:, None])           # (W, T)
    frames_t = y_pad[:, idx]                                         # (B, W, T) bf16

    # Time tile: large (<=512, multiple of 128 -> lane-dense stores) to amortize
    # the ~0.35us/step overhead; shrink only to keep >= 2 total grid steps.
    t_ceil = _round_up(T, 128)
    tt = min(512, t_ceil)
    while tt > 128 and B * ((t_ceil + tt - 1) // tt) < 2:
        tt = max(128, _round_up(tt // 2, 128))
    T_pad = ((T + tt - 1) // tt) * tt
    if T_pad != T:
        frames_t = jnp.pad(frames_t, ((0, 0), (0, 0), (0, T_pad - T)))

    # Store straight in the caller's dtype when the TPU handles it natively.
    if in_dtype in (jnp.dtype(jnp.bfloat16), jnp.dtype(jnp.float32)):
        kernel_out_dtype = in_dtype
    else:
        kernel_out_dtype = jnp.dtype(jnp.float32)

    spec = _stft_magnitude_pallas(frames_t, cos_t, sin_t,
                                  out_dtype=kernel_out_dtype, tt=tt,
                                  single_buffer=single_buffer)       # (B, f_pad, T_pad)
    spec = spec[:, :n_freq, :T]                                      # (B, F, T)
    return spec.astype(in_dtype)


# ---------------------------------------------------------------------------
# Module equivalent
# ---------------------------------------------------------------------------
class LinearSpectrogram:
    """JAX/Pallas port of acestep LinearSpectrogram (center=False, 'pow2_sqrt')."""

    def __init__(self, n_fft=2048, win_length=2048, hop_length=512,
                 center=False, mode="pow2_sqrt", compute_dtype=jnp.bfloat16):
        assert not center and mode == "pow2_sqrt"
        assert win_length == n_fft, "win_length != n_fft not needed here"
        assert n_fft % 16 == 0, "n_fft must keep the re/im split sublane-aligned"
        self.n_fft = n_fft
        self.win_length = win_length
        self.hop_length = hop_length
        self.n_freq = n_fft // 2 + 1
        # One-time capability probe (no runtime try/except, no double compile).
        self.single_buffer = _buffered_one_supported()

        W = win_length
        f_half = n_fft // 2
        f_pad = _round_up(self.n_freq, 8)   # F rides the sublane axis -> pad to 8 rows only

        # Periodic Hann window (torch.hann_window default).
        n = jnp.arange(W, dtype=jnp.float32)
        window = 0.5 - 0.5 * jnp.cos(2.0 * jnp.pi * n / W)

        # Window-folded one-sided real-DFT bases, transposed to (F, W) so the
        # matmul emits the (F, T) layout directly.  Angles from (n*k) mod n_fft
        # in int32 keep f32 cos/sin arguments inside [0, 2*pi).
        n_i = jnp.arange(W, dtype=jnp.int32)
        k_cos = jnp.arange(self.n_freq, dtype=jnp.int32)   # includes Nyquist k = n_fft/2
        k_sin = jnp.arange(f_half, dtype=jnp.int32)
        ang_cos = (2.0 * jnp.pi / n_fft) * ((k_cos[:, None] * n_i[None, :]) % n_fft).astype(jnp.float32)
        ang_sin = (2.0 * jnp.pi / n_fft) * ((k_sin[:, None] * n_i[None, :]) % n_fft).astype(jnp.float32)
        cos_t = jnp.cos(ang_cos) * window[None, :]           # (n_freq, W)
        sin_t = jnp.sin(ang_sin) * window[None, :]           # (f_half, W); sign irrelevant for magnitude
        cos_t = jnp.pad(cos_t, ((0, f_pad - self.n_freq), (0, 0)))
        self.cos_t = cos_t.astype(compute_dtype)
        self.sin_t = sin_t.astype(compute_dtype)

    def __call__(self, y):
        return _linear_spectrogram_fwd(
            y, self.cos_t, self.sin_t,
            n_fft=self.n_fft, win_length=self.win_length,
            hop_length=self.hop_length, single_buffer=self.single_buffer)


# ---------------------------------------------------------------------------
# Pure-JAX reference (exact rfft) for a silent sanity check
# ---------------------------------------------------------------------------
def _reference(y, n_fft, win_length, hop_length):
    if y.ndim == 3:
        y = y[:, 0, :]
    dtype = y.dtype
    y = y.astype(jnp.float32)
    pad_l = (win_length - hop_length) // 2
    pad_r = (win_length - hop_length + 1) // 2
    y = jnp.pad(y, ((0, 0), (pad_l, pad_r)), mode="reflect")
    B, Lp = y.shape
    n_frames = 1 + (Lp - n_fft) // hop_length
    n = jnp.arange(win_length, dtype=jnp.float32)
    window = 0.5 - 0.5 * jnp.cos(2.0 * jnp.pi * n / win_length)
    idx = (jnp.arange(n_frames)[:, None] * hop_length
           + jnp.arange(n_fft)[None, :])
    frames = y[:, idx] * window[None, None, :]
    spec = jnp.fft.rfft(frames, n=n_fft, axis=-1)                    # (B, T, F)
    mag = jnp.sqrt(jnp.real(spec) ** 2 + jnp.imag(spec) ** 2 + 1e-6)
    return jnp.transpose(mag, (0, 2, 1)).astype(dtype)               # (B, F, T)


if __name__ == "__main__":
    # Small, structure-preserving shapes: n_fft=win=128, hop=32, B=2, L=2048.
    # -> F=65 (padded to 72 rows in-kernel), T=64 frames/batch (padded to 128),
    #    grid = (2, 1) so both megacore TensorCores get a step.
    n_fft, hop = 128, 32
    B, L = 2, 2048

    key = jax.random.PRNGKey(0)
    y = jax.random.normal(key, (B, 1, L), dtype=jnp.float32)         # (B, 1, L) like audio

    mod = LinearSpectrogram(n_fft=n_fft, win_length=n_fft, hop_length=hop,
                            center=False, mode="pow2_sqrt")
    spec = mod(y)
    spec = jax.block_until_ready(spec)

    ref = _reference(y, n_fft, n_fft, hop)
    assert spec.shape == ref.shape, (spec.shape, ref.shape)
    err = float(jnp.max(jnp.abs(spec - ref)))
    scale = float(jnp.max(jnp.abs(ref)))
    # bf16 MXU operands -> relative tolerance (f32 accumulation keeps it tight).
    assert err <= 2e-2 * scale + 1e-3, (err, scale)

    print("KERNEL_OK")
</pallas_src>

<mosaic_0001>
module attributes {stable_mosaic.version = 11 : i64} {
  func.func @_stft_mag_kernel(%arg0: i32, %arg1: i32, %arg2: memref<1x128x128xbf16, #tpu.memory_space<vmem>>, %arg3: memref<72x128xbf16, #tpu.memory_space<vmem>>, %arg4: memref<64x128xbf16, #tpu.memory_space<vmem>>, %arg5: memref<1x72x128xf32, #tpu.memory_space<vmem>>) attributes {dimension_semantics = [#tpu.dimension_semantics<parallel>, #tpu.dimension_semantics<parallel>], iteration_bounds = array<i64: 2, 1>, scalar_prefetch = 0 : i64, scratch_operands = 0 : i64, tpu.core_type = #tpu.core_type<tc>, window_params = [{transform_indices = @transform_0, window_bounds = array<i64: 1, 128, 128>}, {pipeline_mode = #tpu.pipeline_mode<synchronous>, transform_indices = @transform_1, window_bounds = array<i64: 72, 128>}, {pipeline_mode = #tpu.pipeline_mode<synchronous>, transform_indices = @transform_2, window_bounds = array<i64: 64, 128>}, {transform_indices = @transform_3, window_bounds = array<i64: 1, 72, 128>}]} {
    %c0 = arith.constant 0 : index
    %c0_0 = arith.constant 0 : index
    %c0_1 = arith.constant 0 : index
    %0 = vector.load %arg2[%c0, %c0_0, %c0_1] : memref<1x128x128xbf16, #tpu.memory_space<vmem>>, vector<1x128x128xbf16>
    %1 = vector.shape_cast %0 : vector<1x128x128xbf16> to vector<128x128xbf16>
    %c0_2 = arith.constant 0 : index
    %c0_3 = arith.constant 0 : index
    %2 = vector.load %arg3[%c0_2, %c0_3] : memref<72x128xbf16, #tpu.memory_space<vmem>>, vector<72x128xbf16>
    %cst = arith.constant dense<0.000000e+00> : vector<72x128xf32>
    %3 = tpu.matmul %2, %1, %cst {dimension_numbers = #tpu.dot_dimension_numbers<[1], [0], [0], [1], [0, 0, 1, 1], [], []>} : vector<72x128xbf16>, vector<128x128xbf16>, vector<72x128xf32> -> vector<72x128xf32>
    %c0_4 = arith.constant 0 : index
    %c0_5 = arith.constant 0 : index
    %4 = vector.load %arg4[%c0_4, %c0_5] : memref<64x128xbf16, #tpu.memory_space<vmem>>, vector<64x128xbf16>
    %cst_6 = arith.constant dense<0.000000e+00> : vector<64x128xf32>
    %5 = tpu.matmul %4, %1, %cst_6 {dimension_numbers = #tpu.dot_dimension_numbers<[1], [0], [0], [1], [0, 0, 1, 1], [], []>} : vector<64x128xbf16>, vector<128x128xbf16>, vector<64x128xf32> -> vector<64x128xf32>
    %6 = vector.extract_strided_slice %3 {offsets = [0, 0], sizes = [64, 128], strides = [1, 1]} : vector<72x128xf32> to vector<64x128xf32>
    %7 = vector.extract_strided_slice %3 {offsets = [64, 0], sizes = [8, 128], strides = [1, 1]} : vector<72x128xf32> to vector<8x128xf32>
    %8 = arith.mulf %6, %6 : vector<64x128xf32>
    %9 = arith.mulf %5, %5 : vector<64x128xf32>
    %10 = arith.addf %8, %9 : vector<64x128xf32>
    %cst_7 = arith.constant 9.99999997E-7 : f32
    %11 = vector.broadcast %cst_7 : f32 to vector<64x128xf32>
    %12 = arith.addf %10, %11 : vector<64x128xf32>
    %13 = math.sqrt %12 : vector<64x128xf32>
    %c0_8 = arith.constant 0 : index
    %c0_9 = arith.constant 0 : index
    %c0_10 = arith.constant 0 : index
    %14 = vector.load %arg5[%c0_8, %c0_9, %c0_10] : memref<1x72x128xf32, #tpu.memory_space<vmem>>, vector<1x64x128xf32>
    %15 = vector.shape_cast %14 : vector<1x64x128xf32> to vector<64x128xf32>
    %16 = vector.shape_cast %13 : vector<64x128xf32> to vector<1x64x128xf32>
    tpu.vector_store %arg5[%c0_8, %c0_9, %c0_10], %16 {strides = array<i32>} : memref<1x72x128xf32, #tpu.memory_space<vmem>>, vector<1x64x128xf32>,
    %17 = arith.mulf %7, %7 : vector<8x128xf32>
    %cst_11 = arith.constant 9.99999997E-7 : f32
    %18 = vector.broadcast %cst_11 : f32 to vector<8x128xf32>
    %19 = arith.addf %17, %18 : vector<8x128xf32>
    %20 = math.sqrt %19 : vector<8x128xf32>
    %c0_12 = arith.constant 0 : index
    %c64 = arith.constant 64 : index
    %c0_13 = arith.constant 0 : index
    %21 = vector.load %arg5[%c0_12, %c64, %c0_13] : memref<1x72x128xf32, #tpu.memory_space<vmem>>, vector<1x8x128xf32>
    %22 = vector.shape_cast %21 : vector<1x8x128xf32> to vector<8x128xf32>
    %23 = vector.shape_cast %20 : vector<8x128xf32> to vector<1x8x128xf32>
    tpu.vector_store %arg5[%c0_12, %c64, %c0_13], %23 {strides = array<i32>} : memref<1x72x128xf32, #tpu.memory_space<vmem>>, vector<1x8x128xf32>,
    return
  }
  func.func @transform_0(%arg0: i32, %arg1: i32) -> (i32, i32, i32) {
    %c0_i32 = arith.constant 0 : i32
    %c0_i32_0 = arith.constant 0 : i32
    return %arg0, %c0_i32, %arg1 : i32, i32, i32
  }
  func.func @transform_1(%arg0: i32, %arg1: i32) -> (i32, i32) {
    %c0_i32 = arith.constant 0 : i32
    %c0_i32_0 = arith.constant 0 : i32
    %c0_i32_1 = arith.constant 0 : i32
    return %c0_i32, %c0_i32_0 : i32, i32
  }
  func.func @transform_2(%arg0: i32, %arg1: i32) -> (i32, i32) {
    %c0_i32 = arith.constant 0 : i32
    %c0_i32_0 = arith.constant 0 : i32
    %c0_i32_1 = arith.constant 0 : i32
    return %c0_i32, %c0_i32_0 : i32, i32
  }
  func.func @transform_3(%arg0: i32, %arg1: i32) -> (i32, i32, i32) {
    %c0_i32 = arith.constant 0 : i32
    %c0_i32_0 = arith.constant 0 : i32
    return %arg0, %c0_i32, %arg1 : i32, i32, i32
  }
}

</mosaic_0001>

<llo_original>
// kernel: _linear_spectrogram_fwd.1
$region0: #{_linear_spectrogram_fwd.1}
  #allocation0 [shape = 'u32[]', space=smem, size = 0x4, offset = 0x4, fixed_abs, tag = 'smem constant byte address 0x4 - core index']
  #allocation1 [shape = 'u32[72,128]{1,0:T(1,128)}', space=vmem, size = 0x9000, scoped, tag = 'internal scratch']
  %s0 = inlined_call_operand.vmem [shape: bf16[2,128,128], index: 0, kind: input, shape index: {}]
  %s1 = inlined_call_operand.vmem [shape: bf16[72,128], index: 1, kind: input, shape index: {}]
  %s2 = inlined_call_operand.vmem [shape: bf16[64,128], index: 2, kind: input, shape index: {}]
  %s3 = inlined_call_operand.vmem [shape: f32[2,72,128], index: 3, kind: output, shape index: {}]
  %s4 = sld [smem:[#allocation0]]
  $region45: #{_linear_spectrogram_fwd.1} parent=0
    _
  %s6 = ssub.s32 1, %s4
  %s7 = scalar_select 0, %s6, %s4
  loop: start=0, step=1, limit=4
  $region2: #{_linear_spectrogram_fwd.1} parent=0 // loop_pre_header
    _
  $region3: #{_linear_spectrogram_fwd.1} parent=0 // loop_header
    %s9 = sphi 0, %s13
    %p10 = scmp.ge.s32.totalorder %s9, 4
    %s16 = sphi 0, %s28
    %s17 = sphi 0, %s24
    %s18 = sphi 0, %s16
    %s19 = sphi 0, %s17
    %s20 = sphi 0, %s18
    %s21 = sphi 0, %s19
    %s33 = sphi 0, %s35
    %s36 = sphi 0, %s33
    %s37 = sphi 0, %s36
    %s53 = sphi 0, %s37
    %s57 = sphi 0, %s57
    %s59 = sphi 0, %s57
    %s60 = sphi 0, %s59
    %s74 = sphi 0, %s60
    %s78 = sphi 0, %s78
    %s80 = sphi 0, %s78
    %s81 = sphi 0, %s80
    %s95 = sphi 0, %s81
    %s103 = sphi 0, %s105
    %s106 = sphi 0, %s103
    %s107 = sphi 0, %s106
    %s123 = sphi 0, %s107
  $region4: #{_linear_spectrogram_fwd.1} parent=0 // loop_header_branch
    %12 = sbr.rel (%p10) target = $region8
  $region5: #{_linear_spectrogram_fwd.1} parent=0 // loop_body
    %s14 = ssub.s32 %s9, 1
    %s15 = ssub.s32 %s9, 2
    %s22 = sadd.s32 1, %s17
    %p23 = scmp.ge.s32.totalorder %s22, 1
    %s24 = scalar_select %p23, 0, %s22
    %s25 = sadd.s32 1, %s16
    %s26 = scalar_select %p23, %s25, %s16
    %p27 = scmp.ge.s32.totalorder %s26, 2
    %s28 = scalar_select %p27, 0, %s26
    %s29 = ssub.s32 %s16, %s28
    %s30 = ssub.s32 %s17, %s24
    %s31 = sor.u32 %s29, %s30
    %p32 = scmp.eq.s32.totalorder %s31, 0
    %s34 = sadd.s32 %s33, 1
    %s35 = scalar_select %p32, %s33, %s34
    %p38 = pneg %p32
    %p39 = scmp.eq.s32.totalorder %s9, 1
    %p40 = por %p38, %p39
    %p41 = scmp.ne.s32.totalorder %s33, %s36
    %p42 = scmp.eq.s32.totalorder %s9, 0
    %p43 = por %p41, %p42
    %p44 = scmp.ne.s32.totalorder %s33, %s36
    %p45 = scmp.eq.s32.totalorder %s14, 1
    %p46 = por %p44, %p45
    %p47 = scmp.ne.s32.totalorder %s36, %s37
    %p48 = scmp.eq.s32.totalorder %s14, 0
    %p49 = por %p47, %p48
    %p50 = scmp.ne.s32.totalorder %s36, %s37
    %p51 = scmp.eq.s32.totalorder %s15, 1
    %p52 = por %p50, %p51
    %p54 = scmp.ne.s32.totalorder %s37, %s53
    %p55 = scmp.eq.s32.totalorder %s15, 0
    %p56 = por %p54, %p55
    %s58 = sadd.s32 %s57, 1
    %p61 = scmp.eq.s32.totalorder %s9, 1
    %p62 = scmp.ne.s32.totalorder %s57, %s59
    %p63 = scmp.eq.s32.totalorder %s9, 0
    %p64 = por %p62, %p63
    %p65 = scmp.ne.s32.totalorder %s57, %s59
    %p66 = scmp.eq.s32.totalorder %s14, 1
    %p67 = por %p65, %p66
    %p68 = scmp.ne.s32.totalorder %s59, %s60
    %p69 = scmp.eq.s32.totalorder %s14, 0
    %p70 = por %p68, %p69
    %p71 = scmp.ne.s32.totalorder %s59, %s60
    %p72 = scmp.eq.s32.totalorder %s15, 1
    %p73 = por %p71, %p72
    %p75 = scmp.ne.s32.totalorder %s60, %s74
    %p76 = scmp.eq.s32.totalorder %s15, 0
    %p77 = por %p75, %p76
    %s79 = sadd.s32 %s78, 1
    %p82 = scmp.eq.s32.totalorder %s9, 1
    %p83 = scmp.ne.s32.totalorder %s78, %s80
    %p84 = scmp.eq.s32.totalorder %s9, 0
    %p85 = por %p83, %p84
    %p86 = scmp.ne.s32.totalorder %s78, %s80
    %p87 = scmp.eq.s32.totalorder %s14, 1
    %p88 = por %p86, %p87
    %p89 = scmp.ne.s32.totalorder %s80, %s81
    %p90 = scmp.eq.s32.totalorder %s14, 0
    %p91 = por %p89, %p90
    %p92 = scmp.ne.s32.totalorder %s80, %s81
    %p93 = scmp.eq.s32.totalorder %s15, 1
    %p94 = por %p92, %p93
    %p96 = scmp.ne.s32.totalorder %s81, %s95
    %p97 = scmp.eq.s32.totalorder %s15, 0
    %p98 = por %p96, %p97
    %s99 = ssub.s32 %s16, %s28
    %s100 = ssub.s32 %s17, %s24
    %s101 = sor.u32 %s99, %s100
    %p102 = scmp.eq.s32.totalorder %s101, 0
    %s104 = sadd.s32 %s103, 1
    %s105 = scalar_select %p102, %s103, %s104
    %p108 = pneg %p102
    %p109 = scmp.eq.s32.totalorder %s9, 1
    %p110 = por %p108, %p109
    %p111 = scmp.ne.s32.totalorder %s103, %s106
    %p112 = scmp.eq.s32.totalorder %s9, 0
    %p113 = por %p111, %p112
    %p114 = scmp.ne.s32.totalorder %s103, %s106
    %p115 = scmp.eq.s32.totalorder %s14, 1
    %p116 = por %p114, %p115
    %p117 = scmp.ne.s32.totalorder %s106, %s107
    %p118 = scmp.eq.s32.totalorder %s14, 0
    %p119 = por %p117, %p118
    %p120 = scmp.ne.s32.totalorder %s106, %s107
    %p121 = scmp.eq.s32.totalorder %s15, 1
    %p122 = por %p120, %p121
    %p124 = scmp.ne.s32.totalorder %s107, %s123
    %p125 = scmp.eq.s32.totalorder %s15, 0
    %p126 = por %p124, %p125
    %p127 = scmp.le.s32.totalorder 1, %s9
    %p128 = scmp.lt.s32.totalorder %s9, 3
    %p129 = pnand %p127, %p128
    %p130 = pneg %p129
    // Predicated region
    $region9: #{_linear_spectrogram_fwd.1} parent=5 // pred_check
      _
    $region10: #{_linear_spectrogram_fwd.1} parent=5 // pred_check_branch
      %132 = sbr.rel (%p129) target = $region12
    $region11: #{_linear_spectrogram_fwd.1} parent=5 // pred_region
      %s133 = ssub.s32 %s9, 1
      // Predicated region
      $region13: #{_linear_spectrogram_fwd.1} parent=11 // pred_check
        %p134 = pneg %p70
      $region14: #{_linear_spectrogram_fwd.1} parent=11 // pred_check_branch
        %136 = sbr.rel (%p134) target = $region16
      $region15: #{_linear_spectrogram_fwd.1} parent=11 // pred_region
        _
      $region16: #{_linear_spectrogram_fwd.1} parent=11 // pred_fallthru
        _
      // Predicated region
      $region17: #{_linear_spectrogram_fwd.1} parent=11 // pred_check
        %p137 = pneg %p91
      $region18: #{_linear_spectrogram_fwd.1} parent=11 // pred_check_branch
        %139 = sbr.rel (%p137) target = $region20
      $region19: #{_linear_spectrogram_fwd.1} parent=11 // pred_region
        _
      $region20: #{_linear_spectrogram_fwd.1} parent=11 // pred_fallthru
        _
    $region12: #{_linear_spectrogram_fwd.1} parent=5 // pred_fallthru
      _
    %p140 = scmp.lt.s32.totalorder %s9, 2
    // Predicated region
    $region21: #{_linear_spectrogram_fwd.1} parent=5 // pred_check
      %p141 = pneg %p140
    $region22: #{_linear_spectrogram_fwd.1} parent=5 // pred_check_branch
      %143 = sbr.rel (%p141) target = $region24
    $region23: #{_linear_spectrogram_fwd.1} parent=5 // pred_region
      // Predicated region
      $region25: #{_linear_spectrogram_fwd.1} parent=23 // pred_check
        %p144 = pneg %p43
      $region26: #{_linear_spectrogram_fwd.1} parent=23 // pred_check_branch
        %146 = sbr.rel (%p144) target = $region28
      $region27: #{_linear_spectrogram_fwd.1} parent=23 // pred_region
        %p147 = scmp.lt.s32.totalorder %s16, 1
        %s148 = scalar_select %p147, %s16, 1
        %p149 = scmp.lt.s32.totalorder %s17, 0
        %s150 = scalar_select %p149, %s17, 0
        %s151 = smul.addr %s148, 16
        %s152 = sadd.s32 %s150, %s151
        %s153 = smul.addr %s152, 4
        %s154 = scalar_lea.vmem %s0, %s153
      $region28: #{_linear_spectrogram_fwd.1} parent=23 // pred_fallthru
        _
    $region24: #{_linear_spectrogram_fwd.1} parent=5 // pred_fallthru
      _
    %p155 = scmp.le.s32.totalorder 1, %s9
    %p156 = scmp.lt.s32.totalorder %s9, 3
    %p157 = pnand %p155, %p156
    %p158 = pneg %p157
    // Predicated region
    $region29: #{_linear_spectrogram_fwd.1} parent=5 // pred_check
      _
    $region30: #{_linear_spectrogram_fwd.1} parent=5 // pred_check_branch
      %160 = sbr.rel (%p157) target = $region32
    $region31: #{_linear_spectrogram_fwd.1} parent=5 // pred_region
      %s161 = ssub.s32 %s9, 1
      %p162 = scmp.lt.s32.totalorder %s18, 1
      %s163 = scalar_select %p162, %s18, 1
      %p164 = scmp.lt.s32.totalorder %s19, 0
      %s165 = scalar_select %p164, %s19, 0
      %s166 = smul.addr %s163, 16
      %s167 = sadd.s32 %s165, %s166
      %s168 = smul.addr %s167, 4
      %s169 = scalar_lea.vmem %s0, %s168
      %p170 = pneg %p49
      %p171 = pneg %p46
      %p172 = pneg %p70
      %p173 = pneg %p67
      %p174 = pneg %p91
      %p175 = pneg %p88
      %p176 = pneg %p119
      %p177 = pneg %p116
      %p178 = scmp.lt.s32.totalorder %s18, 1
      %s179 = scalar_select %p178, %s18, 1
      %p180 = scmp.lt.s32.totalorder %s19, 0
      %s181 = scalar_select %p180, %s19, 0
      %s182 = smul.addr %s179, 9
      %s183 = sadd.s32 %s181, %s182
      %s184 = smul.addr %s183, 8
      %s185 = scalar_lea.vmem %s3, %s184
      %p186 = scmp.lt.s32.totalorder %s18, 1
      %s187 = scalar_select %p186, %s18, 1
      %p188 = scmp.lt.s32.totalorder %s19, 0
      %s189 = scalar_select %p188, %s19, 0
      %s190 = smul.addr %s187, 16
      %s191 = sadd.s32 %s189, %s190
      %s192 = smul.addr %s191, 4
      %s193 = scalar_lea.vmem %s0, %s192
      %p194 = scmp.lt.s32.totalorder %s18, 1
      %s195 = scalar_select %p194, %s18, 1
      %p196 = scmp.lt.s32.totalorder %s19, 0
      %s197 = scalar_select %p196, %s19, 0
      %s198 = smul.addr %s195, 9
      %s199 = sadd.s32 %s197, %s198
      %s200 = smul.addr %s199, 8
      %s201 = scalar_lea.vmem %s3, %s200
      %v202 = vld [vmem:[%s193] sm:$0xf]
      %v203 = vld [vmem:[%s193 + $0x4] sm:$0xf]
      %v204 = vld [vmem:[%s193 + $0x8] sm:$0xf]
      %v205 = vld [vmem:[%s193 + $0xc] sm:$0xf]
      %v206 = vld [vmem:[%s193 + $0x10] sm:$0xf]
      %v207 = vld [vmem:[%s193 + $0x14] sm:$0xf]
      %v208 = vld [vmem:[%s193 + $0x18] sm:$0xf]
      %v209 = vld [vmem:[%s193 + $0x1c] sm:$0xf]
      %v210 = vld [vmem:[%s193 + $0x20] sm:$0xf]
      %v211 = vld [vmem:[%s193 + $0x24] sm:$0xf]
      %v212 = vld [vmem:[%s193 + $0x28] sm:$0xf]
      %v213 = vld [vmem:[%s193 + $0x2c] sm:$0xf]
      %v214 = vld [vmem:[%s193 + $0x30] sm:$0xf]
      %v215 = vld [vmem:[%s193 + $0x34] sm:$0xf]
      %v216 = vld [vmem:[%s193 + $0x38] sm:$0xf]
      %v217 = vld [vmem:[%s193 + $0x3c] sm:$0xf]
      %v218 = vld [vmem:[%s1] sm:$0xf]
      %v219 = vld [vmem:[%s1 + $0x4] sm:$0xf]
      %v220 = vld [vmem:[%s1 + $0x8] sm:$0xf]
      %v221 = vld [vmem:[%s1 + $0xc] sm:$0xf]
      %v222 = vld [vmem:[%s1 + $0x10] sm:$0xf]
      %v223 = vld [vmem:[%s1 + $0x14] sm:$0xf]
      %v224 = vld [vmem:[%s1 + $0x18] sm:$0xf]
      %v225 = vld [vmem:[%s1 + $0x1c] sm:$0xf]
      %v226 = vld [vmem:[%s1 + $0x20] sm:$0xf]
      %v236 = vunpack.c.l.b16 %v218
      %v237 = vunpack.c.l.b16 %v219
      %v238 = vunpack.c.l.b16 %v220
      %v239 = vunpack.c.l.b16 %v221
      %v240 = vunpack.c.l.b16 %v222
      %v241 = vunpack.c.l.b16 %v223
      %v242 = vunpack.c.l.b16 %v224
      %v243 = vunpack.c.l.b16 %v225
      %v244 = vunpack.c.l.b16 %v226
      %v245 = vpack.c.b16 %v237, %v236
      %v246 = vpack.c.b16 %v239, %v238
      %v247 = vpack.c.b16 %v241, %v240
      %v248 = vpack.c.b16 %v243, %v242
      %v249 = vpack.c.b16 %v244, %v244
      %v271 = vunpack.c.l.b16 %v202
      %v272 = vunpack.c.l.b16 %v203
      %v273 = vunpack.c.l.b16 %v204
      %v274 = vunpack.c.l.b16 %v205
      %v275 = vunpack.c.l.b16 %v206
      %v276 = vunpack.c.l.b16 %v207
      %v277 = vunpack.c.l.b16 %v208
      %v278 = vunpack.c.l.b16 %v209
      %v279 = vunpack.c.l.b16 %v210
      %v280 = vunpack.c.l.b16 %v211
      %v281 = vunpack.c.l.b16 %v212
      %v282 = vunpack.c.l.b16 %v213
      %v283 = vunpack.c.l.b16 %v214
      %v284 = vunpack.c.l.b16 %v215
      %v285 = vunpack.c.l.b16 %v216
      %v286 = vunpack.c.l.b16 %v217
      %v287 = vpack.c.b16 %v272, %v271
      %v288 = vpack.c.b16 %v274, %v273
      %v289 = vpack.c.b16 %v276, %v275
      %v290 = vpack.c.b16 %v278, %v277
      %v291 = vpack.c.b16 %v280, %v279
      %v292 = vpack.c.b16 %v282, %v281
      %v293 = vpack.c.b16 %v284, %v283
      %v294 = vpack.c.b16 %v286, %v285
      %303 = vmatpush.bf16.msra.mxu0 %v294
      %304 = vmatpush.bf16.msra.mxu0 %v293
      %305 = vmatpush.bf16.msra.mxu0 %v292
      %306 = vmatpush.bf16.msra.mxu0 %v291
      %307 = vmatpush.bf16.msra.mxu0 %v290
      %308 = vmatpush.bf16.msra.mxu0 %v289
      %309 = vmatpush.bf16.msra.mxu0 %v288
      %310 = vmatpush.bf16.msra.mxu0 %v287
      %311 = vmatmul.bf16.gmra.mxu0 %v245
      %v312 = vpop.f32.mrf.mxu0
      %v313 = vadd.f32 0.0, %v312
      %v314 = vpop.f32.mrf.mxu0
      %v315 = vadd.f32 0.0, %v314
      %316 = vmatmul.bf16.gmra.mxu0 %v246
      %v317 = vpop.f32.mrf.mxu0
      %v318 = vadd.f32 0.0, %v317
      %v319 = vpop.f32.mrf.mxu0
      %v320 = vadd.f32 0.0, %v319
      %321 = vmatmul.bf16.gmra.mxu0 %v247
      %v322 = vpop.f32.mrf.mxu0
      %v323 = vadd.f32 0.0, %v322
      %v324 = vpop.f32.mrf.mxu0
      %v325 = vadd.f32 0.0, %v324
      %326 = vmatmul.bf16.gmra.mxu0 %v248
      %v327 = vpop.f32.mrf.mxu0
      %v328 = vadd.f32 0.0, %v327
      %v329 = vpop.f32.mrf.mxu0
      %v330 = vadd.f32 0.0, %v329
      %331 = vmatmul.bf16.gmra.mxu0 %v249
      %v332 = vpop.f32.mrf.mxu0
      %v333 = vadd.f32 0.0, %v332
      %v334 = vpop.f32.mrf.mxu0
      %335 = vdwg.mxu0
      %v336 = vld [vmem:[%s2] sm:$0xf]
      %v337 = vld [vmem:[%s2 + $0x4] sm:$0xf]
      %v338 = vld [vmem:[%s2 + $0x8] sm:$0xf]
      %v339 = vld [vmem:[%s2 + $0xc] sm:$0xf]
      %v340 = vld [vmem:[%s2 + $0x10] sm:$0xf]
      %v341 = vld [vmem:[%s2 + $0x14] sm:$0xf]
      %v342 = vld [vmem:[%s2 + $0x18] sm:$0xf]
      %v343 = vld [vmem:[%s2 + $0x1c] sm:$0xf]
      %v352 = vunpack.c.l.b16 %v336
      %v353 = vunpack.c.l.b16 %v337
      %v354 = vunpack.c.l.b16 %v338
      %v355 = vunpack.c.l.b16 %v339
      %v356 = vunpack.c.l.b16 %v340
      %v357 = vunpack.c.l.b16 %v341
      %v358 = vunpack.c.l.b16 %v342
      %v359 = vunpack.c.l.b16 %v343
      %v360 = vpack.c.b16 %v353, %v352
      %v361 = vpack.c.b16 %v355, %v354
      %v362 = vpack.c.b16 %v357, %v356
      %v363 = vpack.c.b16 %v359, %v358
      %368 = vmatpush.bf16.msra.mxu0 %v294
      %369 = vmatpush.bf16.msra.mxu0 %v293
      %370 = vmatpush.bf16.msra.mxu0 %v292
      %371 = vmatpush.bf16.msra.mxu0 %v291
      %372 = vmatpush.bf16.msra.mxu0 %v290
      %373 = vmatpush.bf16.msra.mxu0 %v289
      %374 = vmatpush.bf16.msra.mxu0 %v288
      %375 = vmatpush.bf16.msra.mxu0 %v287
      %376 = vmatmul.bf16.gmra.mxu0 %v360
      %v377 = vpop.f32.mrf.mxu0
      %v378 = vadd.f32 0.0, %v377
      %v379 = vpop.f32.mrf.mxu0
      %v380 = vadd.f32 0.0, %v379
      %381 = vmatmul.bf16.gmra.mxu0 %v361
      %v382 = vpop.f32.mrf.mxu0
      %v383 = vadd.f32 0.0, %v382
      %v384 = vpop.f32.mrf.mxu0
      %v385 = vadd.f32 0.0, %v384
      %386 = vmatmul.bf16.gmra.mxu0 %v362
      %v387 = vpop.f32.mrf.mxu0
      %v388 = vadd.f32 0.0, %v387
      %v389 = vpop.f32.mrf.mxu0
      %v390 = vadd.f32 0.0, %v389
      %391 = vmatmul.bf16.gmra.mxu0 %v363
      %v392 = vpop.f32.mrf.mxu0
      %v393 = vadd.f32 0.0, %v392
      %v394 = vpop.f32.mrf.mxu0
      %v395 = vadd.f32 0.0, %v394
      %396 = vdwg.mxu0
      %v397 = vmul.f32 %v313, %v313
      %v398 = vmul.f32 %v315, %v315
      %v399 = vmul.f32 %v318, %v318
      %v400 = vmul.f32 %v320, %v320
      %v401 = vmul.f32 %v323, %v323
      %v402 = vmul.f32 %v325, %v325
      %v403 = vmul.f32 %v328, %v328
      %v404 = vmul.f32 %v330, %v330
      %v405 = vmul.f32 %v378, %v378
      %v406 = vmul.f32 %v380, %v380
      %v407 = vmul.f32 %v383, %v383
      %v408 = vmul.f32 %v385, %v385
      %v409 = vmul.f32 %v388, %v388
      %v410 = vmul.f32 %v390, %v390
      %v411 = vmul.f32 %v393, %v393
      %v412 = vmul.f32 %v395, %v395
      %v413 = vadd.f32 %v397, %v405
      %v414 = vadd.f32 %v398, %v406
      %v415 = vadd.f32 %v399, %v407
      %v416 = vadd.f32 %v400, %v408
      %v417 = vadd.f32 %v401, %v409
      %v418 = vadd.f32 %v402, %v410
      %v419 = vadd.f32 %v403, %v411
      %v420 = vadd.f32 %v404, %v412
      %v421 = vadd.f32 %v413, 1e-06
      %v422 = vadd.f32 %v414, 1e-06
      %v423 = vadd.f32 %v415, 1e-06
      %v424 = vadd.f32 %v416, 1e-06
      %v425 = vadd.f32 %v417, 1e-06
      %v426 = vadd.f32 %v418, 1e-06
      %v427 = vadd.f32 %v419, 1e-06
      %v428 = vadd.f32 %v420, 1e-06
      %v429 = vrsqrt.pop %v421
      %v430 = vmul.f32 %v429, %v421
      %v431 = vmul.f32 %v430, %v429
      %v432 = vmul.f32 0.5, %v431
      %v433 = vsub.f32 1.5, %v432
      %v434 = vmul.f32 %v429, %v433
      %v435 = vmul.f32 %v421, %v434
      %vm436 = vcmp.eq.f32.partialorder %v421, inf
      %v437 = vsel %vm436, %v421, %v435
      %vm438 = vcmp.eq.f32.partialorder %v421, 0.0
      %v439 = vand.u32 %v421, 2147483648
      %v440 = vsel %vm438, %v439, %v437
      %v441 = vrsqrt.pop %v422
      %v442 = vmul.f32 %v441, %v422
      %v443 = vmul.f32 %v442, %v441
      %v444 = vmul.f32 0.5, %v443
      %v445 = vsub.f32 1.5, %v444
      %v446 = vmul.f32 %v441, %v445
      %v447 = vmul.f32 %v422, %v446
      %vm448 = vcmp.eq.f32.partialorder %v422, inf
      %v449 = vsel %vm448, %v422, %v447
      %vm450 = vcmp.eq.f32.partialorder %v422, 0.0
      %v451 = vand.u32 %v422, 2147483648
      %v452 = vsel %vm450, %v451, %v449
      %v453 = vrsqrt.pop %v423
      %v454 = vmul.f32 %v453, %v423
      %v455 = vmul.f32 %v454, %v453
      %v456 = vmul.f32 0.5, %v455
      %v457 = vsub.f32 1.5, %v456
      %v458 = vmul.f32 %v453, %v457
      %v459 = vmul.f32 %v423, %v458
      %vm460 = vcmp.eq.f32.partialorder %v423, inf
      %v461 = vsel %vm460, %v423, %v459
      %vm462 = vcmp.eq.f32.partialorder %v423, 0.0
      %v463 = vand.u32 %v423, 2147483648
      %v464 = vsel %vm462, %v463, %v461
      %v465 = vrsqrt.pop %v424
      %v466 = vmul.f32 %v465, %v424
      %v467 = vmul.f32 %v466, %v465
      %v468 = vmul.f32 0.5, %v467
      %v469 = vsub.f32 1.5, %v468
      %v470 = vmul.f32 %v465, %v469
      %v471 = vmul.f32 %v424, %v470
      %vm472 = vcmp.eq.f32.partialorder %v424, inf
      %v473 = vsel %vm472, %v424, %v471
      %vm474 = vcmp.eq.f32.partialorder %v424, 0.0
      %v475 = vand.u32 %v424, 2147483648
      %v476 = vsel %vm474, %v475, %v473
      %v477 = vrsqrt.pop %v425
      %v478 = vmul.f32 %v477, %v425
      %v479 = vmul.f32 %v478, %v477
      %v480 = vmul.f32 0.5, %v479
      %v481 = vsub.f32 1.5, %v480
      %v482 = vmul.f32 %v477, %v481
      %v483 = vmul.f32 %v425, %v482
      %vm484 = vcmp.eq.f32.partialorder %v425, inf
      %v485 = vsel %vm484, %v425, %v483
      %vm486 = vcmp.eq.f32.partialorder %v425, 0.0
      %v487 = vand.u32 %v425, 2147483648
      %v488 = vsel %vm486, %v487, %v485
      %v489 = vrsqrt.pop %v426
      %v490 = vmul.f32 %v489, %v426
      %v491 = vmul.f32 %v490, %v489
      %v492 = vmul.f32 0.5, %v491
      %v493 = vsub.f32 1.5, %v492
      %v494 = vmul.f32 %v489, %v493
      %v495 = vmul.f32 %v426, %v494
      %vm496 = vcmp.eq.f32.partialorder %v426, inf
      %v497 = vsel %vm496, %v426, %v495
      %vm498 = vcmp.eq.f32.partialorder %v426, 0.0
      %v499 = vand.u32 %v426, 2147483648
      %v500 = vsel %vm498, %v499, %v497
      %v501 = vrsqrt.pop %v427
      %v502 = vmul.f32 %v501, %v427
      %v503 = vmul.f32 %v502, %v501
      %v504 = vmul.f32 0.5, %v503
      %v505 = vsub.f32 1.5, %v504
      %v506 = vmul.f32 %v501, %v505
      %v507 = vmul.f32 %v427, %v506
      %vm508 = vcmp.eq.f32.partialorder %v427, inf
      %v509 = vsel %vm508, %v427, %v507
      %vm510 = vcmp.eq.f32.partialorder %v427, 0.0
      %v511 = vand.u32 %v427, 2147483648
      %v512 = vsel %vm510, %v511, %v509
      %v513 = vrsqrt.pop %v428
      %v514 = vmul.f32 %v513, %v428
      %v515 = vmul.f32 %v514, %v513
      %v516 = vmul.f32 0.5, %v515
      %v517 = vsub.f32 1.5, %v516
      %v518 = vmul.f32 %v513, %v517
      %v519 = vmul.f32 %v428, %v518
      %vm520 = vcmp.eq.f32.partialorder %v428, inf
      %v521 = vsel %vm520, %v428, %v519
      %vm522 = vcmp.eq.f32.partialorder %v428, 0.0
      %v523 = vand.u32 %v428, 2147483648
      %v524 = vsel %vm522, %v523, %v521
      %525 = vst [vmem:[%s201] sm:$0xff] %v440
      %526 = vst [vmem:[%s201 + $0x8] sm:$0xff] %v452
      %527 = vst [vmem:[%s201 + $0x10] sm:$0xff] %v464
      %528 = vst [vmem:[%s201 + $0x18] sm:$0xff] %v476
      %529 = vst [vmem:[%s201 + $0x20] sm:$0xff] %v488
      %530 = vst [vmem:[%s201 + $0x28] sm:$0xff] %v500
      %531 = vst [vmem:[%s201 + $0x30] sm:$0xff] %v512
      %532 = vst [vmem:[%s201 + $0x38] sm:$0xff] %v524
      %v533 = vmul.f32 %v333, %v333
      %v534 = vadd.f32 %v533, 1e-06
      %v535 = vrsqrt.pop %v534
      %v536 = vmul.f32 %v535, %v534
      %v537 = vmul.f32 %v536, %v535
      %v538 = vmul.f32 0.5, %v537
      %v539 = vsub.f32 1.5, %v538
      %v540 = vmul.f32 %v535, %v539
      %v541 = vmul.f32 %v534, %v540
      %vm542 = vcmp.eq.f32.partialorder %v534, inf
      %v543 = vsel %vm542, %v534, %v541
      %vm544 = vcmp.eq.f32.partialorder %v534, 0.0
      %v545 = vand.u32 %v534, 2147483648
      %v546 = vsel %vm544, %v545, %v543
      %547 = vst [vmem:[%s201 + $0x40] sm:$0xff] %v546
      %p548 = scmp.lt.s32.totalorder %s18, 1
      %s549 = scalar_select %p548, %s18, 1
      %p550 = scmp.lt.s32.totalorder %s19, 0
      %s551 = scalar_select %p550, %s19, 0
      %s552 = smul.addr %s549, 9
      %s553 = sadd.s32 %s551, %s552
      %s554 = smul.addr %s553, 8
      %s555 = scalar_lea.vmem %s3, %s554
      // Predicated region
      $region33: #{_linear_spectrogram_fwd.1} parent=31 // pred_check
        %p556 = pneg %p116
      $region34: #{_linear_spectrogram_fwd.1} parent=31 // pred_check_branch
        %558 = sbr.rel (%p556) target = $region36
      $region35: #{_linear_spectrogram_fwd.1} parent=31 // pred_region
        _
      $region36: #{_linear_spectrogram_fwd.1} parent=31 // pred_fallthru
        _
    $region32: #{_linear_spectrogram_fwd.1} parent=5 // pred_fallthru
      _
    %p559 = scmp.le.s32.totalorder 2, %s9
    // Predicated region
    $region37: #{_linear_spectrogram_fwd.1} parent=5 // pred_check
      %p560 = pneg %p559
    $region38: #{_linear_spectrogram_fwd.1} parent=5 // pred_check_branch
      %562 = sbr.rel (%p560) target = $region40
    $region39: #{_linear_spectrogram_fwd.1} parent=5 // pred_region
      %s563 = ssub.s32 %s9, 2
      // Predicated region
      $region41: #{_linear_spectrogram_fwd.1} parent=39 // pred_check
        %p564 = pneg %p122
      $region42: #{_linear_spectrogram_fwd.1} parent=39 // pred_check_branch
        %566 = sbr.rel (%p564) target = $region44
      $region43: #{_linear_spectrogram_fwd.1} parent=39 // pred_region
        %p567 = scmp.lt.s32.totalorder %s20, 1
        %s568 = scalar_select %p567, %s20, 1
        %p569 = scmp.lt.s32.totalorder %s21, 0
        %s570 = scalar_select %p569, %s21, 0
        %s571 = smul.addr %s568, 9
        %s572 = sadd.s32 %s570, %s571
        %s573 = smul.addr %s572, 8
        %s574 = scalar_lea.vmem %s3, %s573
      $region44: #{_linear_spectrogram_fwd.1} parent=39 // pred_fallthru
        _
    $region40: #{_linear_spectrogram_fwd.1} parent=5 // pred_fallthru
      _
  $region6: #{_linear_spectrogram_fwd.1} parent=0 // loop_footer
    %s13 = sadd.s32 1, %s9
  $region7: #{_linear_spectrogram_fwd.1} parent=0 // loop_footer_branch
    %8 = sbr.rel target = $region3
  $region8: #{_linear_spectrogram_fwd.1} parent=0 // loop_exit
    _

</llo_original>
